<compile_context>
chip_gen: v5e
topology: v5e:2x2
jax: 0.10.0
libtpu: 0.0.40
codegen_flags: <defaults>
</compile_context>

<pallas_src>
import math

import jax
import jax.numpy as jnp
from jax.experimental import pallas as pl
from jax.experimental.pallas import tpu as pltpu


def _ssp(x):
    # shifted softplus: softplus(x) - log(2)
    return jax.nn.softplus(x) - math.log(2.0)


def _round_up(x, m):
    return ((x + m - 1) // m) * m


def _cdiv(a, b):
    return -(-a // b)


def _num_tensorcores():
    """2 TensorCores per chip on v7x, 1 on v5e/v6e (and unknown platforms)."""
    try:
        kind = (jax.devices()[0].device_kind or "").lower()
    except Exception:
        return 1
    if "v7" in kind or "tpu7" in kind.replace(" ", ""):
        return 2
    return 1


# ---------------------------------------------------------------------------
# Kernel 1: streaming per-graph segment sums (HBM-bound).
# ---------------------------------------------------------------------------
def segment_sum_kernel(x_ref, start_ref, end_ref, psum_ref, acc_ref):
    c = pl.program_id(0)          # TensorCore split index ("parallel")
    k = pl.program_id(1)          # node-chunk step within this split ("arbitrary")
    steps = pl.num_programs(1)

    @pl.when(k == 0)
    def _init():
        acc_ref[...] = jnp.zeros_like(acc_ref)

    chunk = x_ref.shape[0]
    b_pad = acc_ref.shape[0]

    # 0/1 segment mask for this node chunk, built on the VPU.
    node0 = (c * steps + k) * chunk
    idx = node0 + jax.lax.broadcasted_iota(jnp.int32, (b_pad, chunk), 1)  # global node idx
    mask = (idx >= start_ref[...]) & (idx < end_ref[...])                 # [B_pad, chunk]
    seg_w = mask.astype(x_ref.dtype)                                      # exact 0/1 in bf16

    # Partial per-graph sums: [B_pad, chunk] @ [chunk, D] -> [B_pad, D] (f32 accum).
    acc_ref[...] += jnp.dot(seg_w, x_ref[...], preferred_element_type=jnp.float32)

    @pl.when(k == steps - 1)
    def _store():
        psum_ref[...] = acc_ref[...]


# ---------------------------------------------------------------------------
# Kernel 2: combine partial sums, apply mean, run the tiny MLP (one shot).
# ---------------------------------------------------------------------------
def stress_mlp_kernel(psum_ref, inv_ref, w0_ref, b0_ref, w1_ref, b1_ref,
                      w2_ref, b2_ref, o_ref):
    sums = psum_ref[0]
    for i in range(1, psum_ref.shape[0]):        # static, tiny (n_split <= 2)
        sums = sums + psum_ref[i]
    agg = sums * inv_ref[...]                    # mean (inv = 0 for empty/padded graphs)
    h = _ssp(jnp.dot(agg, w0_ref[...], preferred_element_type=jnp.float32) + b0_ref[...])
    h = _ssp(jnp.dot(h, w1_ref[...], preferred_element_type=jnp.float32) + b1_ref[...])
    out = jnp.dot(h, w2_ref[...], preferred_element_type=jnp.float32) + b2_ref[...]
    o_ref[...] = out.astype(o_ref.dtype)


def stress_head_forward(node_features, n_node, params, *,
                        node_chunk=1024, stream_dtype=jnp.bfloat16, n_split=None):
    """node_features: [N, D] float32, n_node: [B] int (sum must equal N)."""
    N, D = node_features.shape
    B = n_node.shape[0]
    w0, b0, w1, b1, w2, b2 = params
    H = w0.shape[1]
    out_dim = w2.shape[1]
    OUT_PAD = 128                           # lane-dense output slab, sliced to out_dim below
    B_pad = _round_up(max(B, 1), 8)

    # Node-axis tiling: align chunk to the dtype's native sublane packing.
    dsize = jnp.dtype(stream_dtype).itemsize
    pack = max(8, 32 // dsize)              # 8 f32 / 16 bf16 / 32 int8-fp8
    chunk = _round_up(min(int(node_chunk), max(N, pack)), pack)

    if n_split is None:
        n_split = _num_tensorcores()
    total_steps = max(_cdiv(N, chunk), 1)
    n_split = max(1, min(int(n_split), total_steps))
    steps_per_split = _cdiv(total_steps, n_split)
    n_pad = n_split * steps_per_split * chunk

    x = node_features.astype(stream_dtype)
    if n_pad != N:
        x = jnp.pad(x, ((0, n_pad - N), (0, 0)))   # padded rows fall in no segment

    # Per-graph [start, end) offsets and 1/count (0 for empty / padded graphs).
    counts = n_node.astype(jnp.int32)
    ends = jnp.cumsum(counts)
    starts = ends - counts
    inv = jnp.where(counts > 0, 1.0 / jnp.maximum(counts, 1).astype(jnp.float32), 0.0)
    pad_b = B_pad - B
    starts = jnp.pad(starts, (0, pad_b), constant_values=n_pad).reshape(B_pad, 1)
    ends = jnp.pad(ends, (0, pad_b), constant_values=n_pad).reshape(B_pad, 1)
    inv = jnp.pad(inv, (0, pad_b)).reshape(B_pad, 1)

    # ------------------------- Kernel 1: streaming segment sums ------------------------
    lane_d = _round_up(D, 128)
    stream_bytes = 2 * chunk * lane_d * dsize          # double-buffered x tile
    resident_bytes = 3 * B_pad * lane_d * 4            # psum out block (x2) + acc scratch
    small_bytes = 2 * 2 * B_pad * 128 * 4              # starts / ends
    vmem_limit = int(min(max(stream_bytes + resident_bytes + small_bytes + (4 << 20),
                             8 << 20), 32 << 20))

    cost1 = pl.CostEstimate(
        flops=int(2 * B_pad * n_pad * D),
        transcendentals=0,
        bytes_accessed=int(n_pad * D * dsize + n_split * B_pad * D * 4 + 4 * 2 * B_pad))

    x_spec = pl.BlockSpec((chunk, D), lambda c, k: (c * steps_per_split + k, 0))
    se_spec = pl.BlockSpec((B_pad, 1), lambda c, k: (0, 0))
    psum_spec = pl.BlockSpec((None, B_pad, D), lambda c, k: (c, 0, 0))

    psums = pl.pallas_call(
        segment_sum_kernel,
        out_shape=jax.ShapeDtypeStruct((n_split, B_pad, D), jnp.float32),
        grid=(n_split, steps_per_split),
        in_specs=[x_spec, se_spec, se_spec],
        out_specs=psum_spec,
        scratch_shapes=[pltpu.VMEM((B_pad, D), jnp.float32)],
        compiler_params=pltpu.CompilerParams(
            dimension_semantics=("parallel", "arbitrary"),
            vmem_limit_bytes=vmem_limit),
        cost_estimate=cost1,
    )(x, starts, ends)

    # ------------------------- Kernel 2: combine + mean + MLP --------------------------
    w0f, b0f = w0.astype(jnp.float32), b0.astype(jnp.float32)
    w1f, b1f = w1.astype(jnp.float32), b1.astype(jnp.float32)
    w2p = jnp.pad(w2.astype(jnp.float32), ((0, 0), (0, OUT_PAD - out_dim)))
    b2p = jnp.pad(b2.astype(jnp.float32), ((0, 0), (0, OUT_PAD - out_dim)))

    cost2 = pl.CostEstimate(
        flops=int(2 * B_pad * (D * H + H * H + H * OUT_PAD) + n_split * B_pad * D),
        transcendentals=int(2 * B_pad * H),
        bytes_accessed=int(4 * (n_split * B_pad * D + D * H + H * H + H * OUT_PAD
                                + 2 * H + OUT_PAD + B_pad * OUT_PAD + B_pad)))

    out_padded = pl.pallas_call(
        stress_mlp_kernel,
        out_shape=jax.ShapeDtypeStruct((B_pad, OUT_PAD), jnp.float32),
        cost_estimate=cost2,
    )(psums, inv, w0f, b0f, w1f, b1f, w2p, b2p)

    return out_padded[:B, :out_dim]


# ---------------------------------------------------------------------------
# Reference + test harness
# ---------------------------------------------------------------------------
def init_params(key, latent_dim, hidden_dim, out_dim=6):
    """Deterministic synthetic init matching torch.nn.Linear shapes ([in, out] + [1, out])."""
    ks = jax.random.split(key, 6)

    def lin(kw, kb, fan_in, fan_out):
        bound = 1.0 / math.sqrt(fan_in)
        w = jax.random.uniform(kw, (fan_in, fan_out), jnp.float32, -bound, bound)
        b = jax.random.uniform(kb, (1, fan_out), jnp.float32, -bound, bound)
        return w, b

    w0, b0 = lin(ks[0], ks[1], latent_dim, hidden_dim)
    w1, b1 = lin(ks[2], ks[3], hidden_dim, hidden_dim)
    w2, b2 = lin(ks[4], ks[5], hidden_dim, out_dim)
    return (w0, b0, w1, b1, w2, b2)


def reference_forward(node_features, n_node, params):
    N, _ = node_features.shape
    B = n_node.shape[0]
    seg_ids = jnp.repeat(jnp.arange(B), n_node, total_repeat_length=N)
    sums = jax.ops.segment_sum(node_features, seg_ids, num_segments=B)
    agg = sums / jnp.maximum(n_node, 1).astype(jnp.float32)[:, None]
    w0, b0, w1, b1, w2, b2 = params
    h = _ssp(agg @ w0 + b0)
    h = _ssp(h @ w1 + b1)
    return h @ w2 + b2


if __name__ == "__main__":
    latent_dim = 32        # latent_dim
    hidden_dim = 32        # mlp_hidden_dim, num_mlp_layers = 2
    N = 200                # total nodes across the batch
    B = 3                  # graphs in batch

    key = jax.random.PRNGKey(0)
    k_feat, k_param = jax.random.split(key)
    node_features = jax.random.normal(k_feat, (N, latent_dim), jnp.float32)
    n_node = jnp.array([90, 70, 40], dtype=jnp.int32)   # sums to N

    params = init_params(k_param, latent_dim, hidden_dim, out_dim=6)
    ref = reference_forward(node_features, n_node, params)

    # f32 streaming, small chunk, forced 2-way node split (exercises the multi-core
    # partial-sum path even on 1-TC chips); tight tolerance.
    pred_f32 = stress_head_forward(node_features, n_node, params,
                                   node_chunk=64, stream_dtype=jnp.float32, n_split=2)
    pred_f32 = jax.block_until_ready(pred_f32)
    assert pred_f32.shape == (B, 6)
    assert jnp.allclose(pred_f32, ref, atol=1e-4, rtol=1e-4), (pred_f32, ref)

    # bf16 streaming, small chunk, single split (exercises multi-step grid on bf16 tiles).
    pred_bf16_small = stress_head_forward(node_features, n_node, params,
                                          node_chunk=64, stream_dtype=jnp.bfloat16, n_split=1)
    pred_bf16_small = jax.block_until_ready(pred_bf16_small)
    assert pred_bf16_small.shape == (B, 6)
    assert jnp.allclose(pred_bf16_small, ref, atol=5e-2, rtol=5e-2), (pred_bf16_small, ref)

    # Default production path: bf16 streaming, chunk=1024, auto TensorCore split.
    pred_default = stress_head_forward(node_features, n_node, params)
    pred_default = jax.block_until_ready(pred_default)
    assert pred_default.shape == (B, 6)
    assert jnp.allclose(pred_default, ref, atol=5e-2, rtol=5e-2), (pred_default, ref)

    print("KERNEL_OK")
</pallas_src>

<mosaic_0001>
module attributes {stable_mosaic.version = 11 : i64} {
  func.func @segment_sum_kernel(%arg0: i32, %arg1: i32, %arg2: memref<64x32xf32, #tpu.memory_space<vmem>>, %arg3: memref<8x1xi32, #tpu.memory_space<vmem>>, %arg4: memref<8x1xi32, #tpu.memory_space<vmem>>, %arg5: memref<1x8x32xf32, #tpu.memory_space<vmem>>, %arg6: memref<8x32xf32, #tpu.memory_space<vmem>>) attributes {dimension_semantics = [#tpu.dimension_semantics<parallel>, #tpu.dimension_semantics<arbitrary>], iteration_bounds = array<i64: 2, 2>, scalar_prefetch = 0 : i64, scratch_operands = 1 : i64, tpu.core_type = #tpu.core_type<tc>, window_params = [{transform_indices = @transform_0, window_bounds = array<i64: 64, 32>}, {pipeline_mode = #tpu.pipeline_mode<synchronous>, transform_indices = @transform_1, window_bounds = array<i64: 8, 1>}, {pipeline_mode = #tpu.pipeline_mode<synchronous>, transform_indices = @transform_2, window_bounds = array<i64: 8, 1>}, {transform_indices = @transform_3, window_bounds = array<i64: 1, 8, 32>}]} {
    %c0_i32 = arith.constant 0 : i32
    %0 = arith.cmpi eq, %arg1, %c0_i32 : i32
    %1 = arith.extui %0 : i1 to i32
    %c0_i32_0 = arith.constant 0 : i32
    %2 = arith.cmpi ne, %1, %c0_i32_0 : i32
    scf.if %2 {
      %cst_11 = arith.constant 0.000000e+00 : f32
      %26 = vector.broadcast %cst_11 : f32 to vector<8x32xf32>
      %c0_12 = arith.constant 0 : index
      %c0_13 = arith.constant 0 : index
      %27 = vector.load %arg6[%c0_12, %c0_13] : memref<8x32xf32, #tpu.memory_space<vmem>>, vector<8x32xf32>
      tpu.vector_store %arg6[%c0_12, %c0_13], %26 {strides = array<i32>} : memref<8x32xf32, #tpu.memory_space<vmem>>, vector<8x32xf32>,
    } else {
    }
    %c2_i32 = arith.constant 2 : i32
    %3 = arith.muli %arg0, %c2_i32 : i32
    %4 = arith.addi %3, %arg1 : i32
    %c64_i32 = arith.constant 64 : i32
    %5 = arith.muli %4, %c64_i32 : i32
    %6 = tpu.iota {dimensions = array<i32: 1>} : vector<8x64xi32>
    %7 = vector.broadcast %5 : i32 to vector<8x64xi32>
    %8 = arith.addi %7, %6 : vector<8x64xi32>
    %c0 = arith.constant 0 : index
    %c0_1 = arith.constant 0 : index
    %9 = vector.load %arg3[%c0, %c0_1] : memref<8x1xi32, #tpu.memory_space<vmem>>, vector<8x1xi32>
    %10 = vector.broadcast %9 : vector<8x1xi32> to vector<8x64xi32>
    %11 = arith.cmpi sge, %8, %10 : vector<8x64xi32>
    %c0_2 = arith.constant 0 : index
    %c0_3 = arith.constant 0 : index
    %12 = vector.load %arg4[%c0_2, %c0_3] : memref<8x1xi32, #tpu.memory_space<vmem>>, vector<8x1xi32>
    %13 = vector.broadcast %12 : vector<8x1xi32> to vector<8x64xi32>
    %14 = arith.cmpi slt, %8, %13 : vector<8x64xi32>
    %15 = arith.andi %11, %14 : vector<8x64xi1>
    %16 = arith.extui %15 : vector<8x64xi1> to vector<8x64xi32>
    %17 = arith.sitofp %16 : vector<8x64xi32> to vector<8x64xf32>
    %c0_4 = arith.constant 0 : index
    %c0_5 = arith.constant 0 : index
    %18 = vector.load %arg6[%c0_4, %c0_5] : memref<8x32xf32, #tpu.memory_space<vmem>>, vector<8x32xf32>
    %c0_6 = arith.constant 0 : index
    %c0_7 = arith.constant 0 : index
    %19 = vector.load %arg2[%c0_6, %c0_7] : memref<64x32xf32, #tpu.memory_space<vmem>>, vector<64x32xf32>
    %cst = arith.constant dense<0.000000e+00> : vector<8x32xf32>
    %20 = tpu.matmul %17, %19, %cst {dimension_numbers = #tpu.dot_dimension_numbers<[1], [0], [0], [1], [0, 0, 1, 1], [], []>} : vector<8x64xf32>, vector<64x32xf32>, vector<8x32xf32> -> vector<8x32xf32>
    %21 = arith.addf %18, %20 : vector<8x32xf32>
    %c0_8 = arith.constant 0 : index
    %c0_9 = arith.constant 0 : index
    %22 = vector.load %arg6[%c0_8, %c0_9] : memref<8x32xf32, #tpu.memory_space<vmem>>, vector<8x32xf32>
    tpu.vector_store %arg6[%c0_8, %c0_9], %21 {strides = array<i32>} : memref<8x32xf32, #tpu.memory_space<vmem>>, vector<8x32xf32>,
    %c1_i32 = arith.constant 1 : i32
    %23 = arith.cmpi eq, %arg1, %c1_i32 : i32
    %24 = arith.extui %23 : i1 to i32
    %c0_i32_10 = arith.constant 0 : i32
    %25 = arith.cmpi ne, %24, %c0_i32_10 : i32
    scf.if %25 {
      %c0_11 = arith.constant 0 : index
      %c0_12 = arith.constant 0 : index
      %26 = vector.load %arg6[%c0_11, %c0_12] : memref<8x32xf32, #tpu.memory_space<vmem>>, vector<8x32xf32>
      %c0_13 = arith.constant 0 : index
      %c0_14 = arith.constant 0 : index
      %c0_15 = arith.constant 0 : index
      %27 = vector.load %arg5[%c0_13, %c0_14, %c0_15] : memref<1x8x32xf32, #tpu.memory_space<vmem>>, vector<1x8x32xf32>
      %28 = vector.shape_cast %27 : vector<1x8x32xf32> to vector<8x32xf32>
      %29 = vector.shape_cast %26 : vector<8x32xf32> to vector<1x8x32xf32>
      tpu.vector_store %arg5[%c0_13, %c0_14, %c0_15], %29 {strides = array<i32>} : memref<1x8x32xf32, #tpu.memory_space<vmem>>, vector<1x8x32xf32>,
    } else {
    }
    return
  }
  func.func @transform_0(%arg0: i32, %arg1: i32) -> (i32, i32) {
    %c2_i32 = arith.constant 2 : i32
    %0 = arith.muli %arg0, %c2_i32 : i32
    %1 = arith.addi %0, %arg1 : i32
    %c0_i32 = arith.constant 0 : i32
    %c0_i32_0 = arith.constant 0 : i32
    return %1, %c0_i32 : i32, i32
  }
  func.func @transform_1(%arg0: i32, %arg1: i32) -> (i32, i32) {
    %c0_i32 = arith.constant 0 : i32
    %c0_i32_0 = arith.constant 0 : i32
    %c0_i32_1 = arith.constant 0 : i32
    return %c0_i32, %c0_i32_0 : i32, i32
  }
  func.func @transform_2(%arg0: i32, %arg1: i32) -> (i32, i32) {
    %c0_i32 = arith.constant 0 : i32
    %c0_i32_0 = arith.constant 0 : i32
    %c0_i32_1 = arith.constant 0 : i32
    return %c0_i32, %c0_i32_0 : i32, i32
  }
  func.func @transform_3(%arg0: i32, %arg1: i32) -> (i32, i32, i32) {
    %c0_i32 = arith.constant 0 : i32
    %c0_i32_0 = arith.constant 0 : i32
    %c0_i32_1 = arith.constant 0 : i32
    return %arg0, %c0_i32, %c0_i32_0 : i32, i32, i32
  }
}

</mosaic_0001>

<llo_original>
// kernel: tpu_custom_call.1
$region0: #{tpu_custom_call.1}
  #allocation0 [shape = 'u32[]', space=smem, size = 0x4, offset = 0x4, fixed_abs, tag = 'smem constant byte address 0x4 - core index']
  #allocation1 [shape = 'u32[72,128]{1,0:T(1,128)}', space=vmem, size = 0x9000, scoped, tag = 'internal scratch']
  #allocation2 [shape = 'f32[8,32]{1,0:T(8,128)}', space=vmem, size = 0x1000, scoped, tag = 'scratch operand']
  %s0 = inlined_call_operand.vmem [shape: f32[256,32], index: 0, kind: input, shape index: {}]
  %s1 = inlined_call_operand.vmem [shape: s32[8,1], index: 1, kind: input, shape index: {}]
  %s2 = inlined_call_operand.vmem [shape: s32[8,1], index: 2, kind: input, shape index: {}]
  %s3 = inlined_call_operand.hbm [shape: f32[2,8,32], index: 3, kind: output, shape index: {}]
  %s4 = sld [smem:[#allocation0]]
  $region53: #{tpu_custom_call.1} parent=0
    _
  %s6 = ssub.s32 1, %s4
  %s7 = scalar_select 0, %s6, %s4
  $region1: #{tpu_custom_call.1} parent=0
    #allocation3 [shape = 'u8[8192]{0}', space=vmem, size = 0x2000, scoped, tag = 'output window, operand 0']
    #allocation4 [shape = 's32[2]{0}', space=sflag, size = 0x8, scoped, tag = 'scoped memory for tpu_custom_call.1']
    %8 = vsyncpa [#allocation4], 0
    %s9 = scalar_lea.sflag [#allocation4], 1
    %10 = vsyncpa %s9, 0
    loop: start=0, step=1, limit=6
    $region2: #{tpu_custom_call.1} parent=1 // loop_pre_header
      _
    $region3: #{tpu_custom_call.1} parent=1 // loop_header
      %s12 = sphi 0, %s16
      %p13 = scmp.ge.s32.totalorder %s12, 6
      %s19 = sphi 0, %s31
      %s20 = sphi 0, %s27
      %s21 = sphi 0, %s19
      %s22 = sphi 0, %s20
      %s23 = sphi 0, %s21
      %s24 = sphi 0, %s22
      %s38 = sphi 0, %s40
      %s41 = sphi 0, %s38
      %s42 = sphi 0, %s41
      %s58 = sphi 0, %s42
      %s62 = sphi 0, %s62
      %s64 = sphi 0, %s62
      %s65 = sphi 0, %s64
      %s79 = sphi 0, %s65
      %s83 = sphi 0, %s83
      %s85 = sphi 0, %s83
      %s86 = sphi 0, %s85
      %s100 = sphi 0, %s86
      %s106 = sphi 0, %s108
      %s109 = sphi 0, %s106
      %s110 = sphi 0, %s109
      %s126 = sphi 0, %s110
    $region4: #{tpu_custom_call.1} parent=1 // loop_header_branch
      %15 = sbr.rel (%p13) target = $region8
    $region5: #{tpu_custom_call.1} parent=1 // loop_body
      %s17 = ssub.s32 %s12, 1
      %s18 = ssub.s32 %s12, 2
      %s25 = sadd.s32 1, %s20
      %p26 = scmp.ge.s32.totalorder %s25, 2
      %s27 = scalar_select %p26, 0, %s25
      %s28 = sadd.s32 1, %s19
      %s29 = scalar_select %p26, %s28, %s19
      %p30 = scmp.ge.s32.totalorder %s29, 2
      %s31 = scalar_select %p30, 0, %s29
      %s32 = smul.u32 %s19, 2
      %s33 = sadd.s32 %s32, %s20
      %s34 = smul.u32 %s31, 2
      %s35 = sadd.s32 %s34, %s27
      %s36 = ssub.s32 %s33, %s35
      %p37 = scmp.eq.s32.totalorder %s36, 0
      %s39 = sadd.s32 %s38, 1
      %s40 = scalar_select %p37, %s38, %s39
      %p43 = pneg %p37
      %p44 = scmp.eq.s32.totalorder %s12, 3
      %p45 = por %p43, %p44
      %p46 = scmp.ne.s32.totalorder %s38, %s41
      %p47 = scmp.eq.s32.totalorder %s12, 0
      %p48 = por %p46, %p47
      %p49 = scmp.ne.s32.totalorder %s38, %s41
      %p50 = scmp.eq.s32.totalorder %s17, 3
      %p51 = por %p49, %p50
      %p52 = scmp.ne.s32.totalorder %s41, %s42
      %p53 = scmp.eq.s32.totalorder %s17, 0
      %p54 = por %p52, %p53
      %p55 = scmp.ne.s32.totalorder %s41, %s42
      %p56 = scmp.eq.s32.totalorder %s18, 3
      %p57 = por %p55, %p56
      %p59 = scmp.ne.s32.totalorder %s42, %s58
      %p60 = scmp.eq.s32.totalorder %s18, 0
      %p61 = por %p59, %p60
      %s63 = sadd.s32 %s62, 1
      %p66 = scmp.eq.s32.totalorder %s12, 3
      %p67 = scmp.ne.s32.totalorder %s62, %s64
      %p68 = scmp.eq.s32.totalorder %s12, 0
      %p69 = por %p67, %p68
      %p70 = scmp.ne.s32.totalorder %s62, %s64
      %p71 = scmp.eq.s32.totalorder %s17, 3
      %p72 = por %p70, %p71
      %p73 = scmp.ne.s32.totalorder %s64, %s65
      %p74 = scmp.eq.s32.totalorder %s17, 0
      %p75 = por %p73, %p74
      %p76 = scmp.ne.s32.totalorder %s64, %s65
      %p77 = scmp.eq.s32.totalorder %s18, 3
      %p78 = por %p76, %p77
      %p80 = scmp.ne.s32.totalorder %s65, %s79
      %p81 = scmp.eq.s32.totalorder %s18, 0
      %p82 = por %p80, %p81
      %s84 = sadd.s32 %s83, 1
      %p87 = scmp.eq.s32.totalorder %s12, 3
      %p88 = scmp.ne.s32.totalorder %s83, %s85
      %p89 = scmp.eq.s32.totalorder %s12, 0
      %p90 = por %p88, %p89
      %p91 = scmp.ne.s32.totalorder %s83, %s85
      %p92 = scmp.eq.s32.totalorder %s17, 3
      %p93 = por %p91, %p92
      %p94 = scmp.ne.s32.totalorder %s85, %s86
      %p95 = scmp.eq.s32.totalorder %s17, 0
      %p96 = por %p94, %p95
      %p97 = scmp.ne.s32.totalorder %s85, %s86
      %p98 = scmp.eq.s32.totalorder %s18, 3
      %p99 = por %p97, %p98
      %p101 = scmp.ne.s32.totalorder %s86, %s100
      %p102 = scmp.eq.s32.totalorder %s18, 0
      %p103 = por %p101, %p102
      %s104 = ssub.s32 %s19, %s31
      %p105 = scmp.eq.s32.totalorder %s104, 0
      %s107 = sadd.s32 %s106, 1
      %s108 = scalar_select %p105, %s106, %s107
      %p111 = pneg %p105
      %p112 = scmp.eq.s32.totalorder %s12, 3
      %p113 = por %p111, %p112
      %p114 = scmp.ne.s32.totalorder %s106, %s109
      %p115 = scmp.eq.s32.totalorder %s12, 0
      %p116 = por %p114, %p115
      %p117 = scmp.ne.s32.totalorder %s106, %s109
      %p118 = scmp.eq.s32.totalorder %s17, 3
      %p119 = por %p117, %p118
      %p120 = scmp.ne.s32.totalorder %s109, %s110
      %p121 = scmp.eq.s32.totalorder %s17, 0
      %p122 = por %p120, %p121
      %p123 = scmp.ne.s32.totalorder %s109, %s110
      %p124 = scmp.eq.s32.totalorder %s18, 3
      %p125 = por %p123, %p124
      %p127 = scmp.ne.s32.totalorder %s110, %s126
      %p128 = scmp.eq.s32.totalorder %s18, 0
      %p129 = por %p127, %p128
      %p130 = scmp.le.s32.totalorder 1, %s12
      %p131 = scmp.lt.s32.totalorder %s12, 5
      %p132 = pnand %p130, %p131
      %p133 = pneg %p132
      // Predicated region
      $region9: #{tpu_custom_call.1} parent=5 // pred_check
        _
      $region10: #{tpu_custom_call.1} parent=5 // pred_check_branch
        %135 = sbr.rel (%p132) target = $region12
      $region11: #{tpu_custom_call.1} parent=5 // pred_region
        %s136 = ssub.s32 %s12, 1
        // Predicated region
        $region13: #{tpu_custom_call.1} parent=11 // pred_check
          %p137 = pneg %p75
        $region14: #{tpu_custom_call.1} parent=11 // pred_check_branch
          %139 = sbr.rel (%p137) target = $region16
        $region15: #{tpu_custom_call.1} parent=11 // pred_region
          _
        $region16: #{tpu_custom_call.1} parent=11 // pred_fallthru
          _
        // Predicated region
        $region17: #{tpu_custom_call.1} parent=11 // pred_check
          %p140 = pneg %p96
        $region18: #{tpu_custom_call.1} parent=11 // pred_check_branch
          %142 = sbr.rel (%p140) target = $region20
        $region19: #{tpu_custom_call.1} parent=11 // pred_region
          _
        $region20: #{tpu_custom_call.1} parent=11 // pred_fallthru
          _
      $region12: #{tpu_custom_call.1} parent=5 // pred_fallthru
        _
      %p143 = scmp.lt.s32.totalorder %s12, 4
      // Predicated region
      $region21: #{tpu_custom_call.1} parent=5 // pred_check
        %p144 = pneg %p143
      $region22: #{tpu_custom_call.1} parent=5 // pred_check_branch
        %146 = sbr.rel (%p144) target = $region24
      $region23: #{tpu_custom_call.1} parent=5 // pred_region
        // Predicated region
        $region25: #{tpu_custom_call.1} parent=23 // pred_check
          %p147 = pneg %p48
        $region26: #{tpu_custom_call.1} parent=23 // pred_check_branch
          %149 = sbr.rel (%p147) target = $region28
        $region27: #{tpu_custom_call.1} parent=23 // pred_region
          %s150 = smul.u32 %s19, 2
          %s151 = sadd.s32 %s150, %s20
          %s152 = smul.u32 8, %s151
          %p153 = scmp.lt.s32.totalorder %s152, 31
          %s154 = scalar_select %p153, %s152, 31
          %s155 = smul.addr %s154, 8
          %s156 = scalar_lea.vmem %s0, %s155
          %s157 = smul.u32 %s19, 2
          %s158 = sadd.s32 %s157, %s20
          %s159 = smul.u32 8, %s158
        $region28: #{tpu_custom_call.1} parent=23 // pred_fallthru
          _
      $region24: #{tpu_custom_call.1} parent=5 // pred_fallthru
        _
      %p160 = scmp.le.s32.totalorder 1, %s12
      %p161 = scmp.lt.s32.totalorder %s12, 5
      %p162 = pnand %p160, %p161
      %p163 = pneg %p162
      // Predicated region
      $region29: #{tpu_custom_call.1} parent=5 // pred_check
        _
      $region30: #{tpu_custom_call.1} parent=5 // pred_check_branch
        %165 = sbr.rel (%p162) target = $region32
      $region31: #{tpu_custom_call.1} parent=5 // pred_region
        %s166 = ssub.s32 %s12, 1
        %s167 = smul.u32 %s21, 2
        %s168 = sadd.s32 %s167, %s22
        %s169 = smul.u32 8, %s168
        %p170 = scmp.lt.s32.totalorder %s169, 31
        %s171 = scalar_select %p170, %s169, 31
        %s172 = smul.addr %s171, 8
        %s173 = scalar_lea.vmem %s0, %s172
        %p174 = pneg %p54
        %p175 = pneg %p51
        %p176 = pneg %p75
        %p177 = pneg %p72
        %p178 = pneg %p96
        %p179 = pneg %p93
        %p180 = pneg %p122
        %p181 = pneg %p119
        %s182 = sand.u32 %s109, 1
        %s183 = scalar_lea.sflag [#allocation4], %s182
        %s184 = sand.u32 %s109, 1
        %s185 = smul.addr %s184, 8
        %s186 = scalar_lea.vmem [#allocation3], %s185
        %s187 = smul.u32 %s21, 2
        %s188 = sadd.s32 %s187, %s22
        %s189 = smul.u32 8, %s188
        %p190 = scmp.lt.s32.totalorder %s189, 31
        %s191 = scalar_select %p190, %s189, 31
        %s192 = smul.addr %s191, 8
        %s193 = scalar_lea.vmem %s0, %s192
        %s194 = smul.u32 %s21, 2
        %s195 = sadd.s32 %s194, %s22
        %s196 = smul.u32 8, %s195
        %p197 = scmp.eq.s32.totalorder %s22, 0
        // Predicated region
        $region33: #{tpu_custom_call.1} parent=31 // pred_check
          %p198 = pneg %p197
        $region34: #{tpu_custom_call.1} parent=31 // pred_check_branch
          %200 = sbr.rel (%p198) target = $region36
        $region35: #{tpu_custom_call.1} parent=31 // pred_region
          %vm201 = vcmask 261120
          %202 = vst.msk [vmem:[#allocation2] sm:$0xff] %vm201, 0.0
        $region36: #{tpu_custom_call.1} parent=31 // pred_fallthru
          _
        %s203 = smul.u32 %s21, 2
        %s204 = sadd.s32 %s203, %s22
        %s205 = smul.u32 %s204, 64
        %v206 = vlaneseq
        %v207 = vand.u32 %v206, 127
        %v208 = vstv %s205
        %v209 = vadd.s32 %v208, %v207
        %v210 = vld [vmem:[%s1] sm:$0xff]
        %211 = vset.pattern.permute.xlu0 0
        %212 = vperm.xlu0 %211, %v210
        %v213 = vpop.permute.xlu0 %212
        %vm214 = vcmp.ge.s32.totalorder %v209, %v213
        %v215 = vld [vmem:[%s2] sm:$0xff]
        %216 = vset.pattern.permute.xlu0 0
        %217 = vperm.xlu0 %216, %v215
        %v218 = vpop.permute.xlu0 %217
        %vm219 = vcmp.lt.s32.totalorder %v209, %v218
        %vm220 = vmand %vm214, %vm219
        %v221 = vsel %vm220, 1, 0
        %v222 = vcvt.s32.f32 %v221
        %v223 = vld [vmem:[#allocation2] sm:$0xff]
        %v224 = vld [vmem:[%s193] sm:$0xff]
        %v225 = vld [vmem:[%s193 + $0x8] sm:$0xff]
        %v226 = vld [vmem:[%s193 + $0x10] sm:$0xff]
        %v227 = vld [vmem:[%s193 + $0x18] sm:$0xff]
        %v228 = vld [vmem:[%s193 + $0x20] sm:$0xff]
        %v229 = vld [vmem:[%s193 + $0x28] sm:$0xff]
        %v230 = vld [vmem:[%s193 + $0x30] sm:$0xff]
        %v231 = vld [vmem:[%s193 + $0x38] sm:$0xff]
        %vm232 = vcmask 523264
        %v234 = vsel %vm232, %v222, 0
        %236 = vmatpush.msra.mxu0 0.0
        %237 = vmatpush.msra.mxu0 0.0
        %238 = vmatpush.msra.mxu0 0.0
        %239 = vmatpush.msra.mxu0 0.0
        %240 = vmatpush.msra.mxu0 0.0
        %241 = vmatpush.msra.mxu0 0.0
        %242 = vmatpush.msra.mxu0 0.0
        %243 = vmatpush.msra.mxu0 0.0
        %244 = vmatpush.msra.mxu0 %v231
        %245 = vmatpush.msra.mxu0 %v230
        %246 = vmatpush.msra.mxu0 %v229
        %247 = vmatpush.msra.mxu0 %v228
        %248 = vmatpush.msra.mxu0 %v227
        %249 = vmatpush.msra.mxu0 %v226
        %250 = vmatpush.msra.mxu0 %v225
        %251 = vmatpush.msra.mxu0 %v224
        %252 = vmatmul.f32.gmra.mxu0 %v234
        %v253 = vpop.f32.mrf.mxu0
        %v254 = vadd.f32 0.0, %v253
        %255 = vdwg.mxu0
        %v256 = vadd.f32 %v223, %v254
        %vm257 = vcmask 261120
        %258 = vst.msk [vmem:[#allocation2] sm:$0xff] %vm257, %v256
        %p259 = scmp.eq.s32.totalorder %s22, 1
        // Predicated region
        $region37: #{tpu_custom_call.1} parent=31 // pred_check
          %p260 = pneg %p259
        $region38: #{tpu_custom_call.1} parent=31 // pred_check_branch
          %262 = sbr.rel (%p260) target = $region40
        $region39: #{tpu_custom_call.1} parent=31 // pred_region
          %v263 = vld [vmem:[#allocation2] sm:$0xff]
          %264 = vst.msk [vmem:[%s186] sm:$0xff] %vm257, %v263
        $region40: #{tpu_custom_call.1} parent=31 // pred_fallthru
          _
        %s265 = sand.u32 %s109, 1
        %s266 = scalar_lea.sflag [#allocation4], %s265
        %s267 = sand.u32 %s109, 1
        %s268 = smul.addr %s267, 8
        %s269 = scalar_lea.vmem [#allocation3], %s268
        // Predicated region
        $region41: #{tpu_custom_call.1} parent=31 // pred_check
          %p270 = pneg %p119
        $region42: #{tpu_custom_call.1} parent=31 // pred_check_branch
          %272 = sbr.rel (%p270) target = $region44
        $region43: #{tpu_custom_call.1} parent=31 // pred_region
          %274 = vsyncadd %s266, 0
          %s275 = smul.addr %s21, 8
          %s276 = scalar_lea.hbm %s3, %s275
          %s278 = sshll.u32 %s269, 4
          %s279 = int_to_ptr.vmem [resolvable:$true] %s278
          %s280 = sshll.u32 %s276, 4
          %s281 = int_to_ptr.hbm [resolvable:$true] %s280
          %283 = dma.vmem_to_hbm [thread:$0]  %s279, 128, %s281, %s266
        $region44: #{tpu_custom_call.1} parent=31 // pred_fallthru
          _
      $region32: #{tpu_custom_call.1} parent=5 // pred_fallthru
        _
      %p284 = scmp.le.s32.totalorder 2, %s12
      // Predicated region
      $region45: #{tpu_custom_call.1} parent=5 // pred_check
        %p285 = pneg %p284
      $region46: #{tpu_custom_call.1} parent=5 // pred_check_branch
        %287 = sbr.rel (%p285) target = $region48
      $region47: #{tpu_custom_call.1} parent=5 // pred_region
        %s288 = ssub.s32 %s12, 2
        // Predicated region
        $region49: #{tpu_custom_call.1} parent=47 // pred_check
          %p289 = pneg %p125
        $region50: #{tpu_custom_call.1} parent=47 // pred_check_branch
          %291 = sbr.rel (%p289) target = $region52
        $region51: #{tpu_custom_call.1} parent=47 // pred_region
          %s292 = sand.u32 %s110, 1
          %s293 = scalar_lea.sflag [#allocation4], %s292
          %s294 = sand.u32 %s110, 1
          %s295 = smul.addr %s294, 8
          %s296 = scalar_lea.vmem [#allocation3], %s295
          %298 = dma.done %s293, 128
        $region52: #{tpu_custom_call.1} parent=47 // pred_fallthru
          _
      $region48: #{tpu_custom_call.1} parent=5 // pred_fallthru
        _
    $region6: #{tpu_custom_call.1} parent=1 // loop_footer
      %s16 = sadd.s32 1, %s12
    $region7: #{tpu_custom_call.1} parent=1 // loop_footer_branch
      %11 = sbr.rel target = $region3
    $region8: #{tpu_custom_call.1} parent=1 // loop_exit
      _
    %299 = vsyncpa [#allocation4], 1
    %s300 = scalar_lea.sflag [#allocation4], 1
    %301 = vsyncpa %s300, 1

</llo_original>
